<compile_context>
chip_gen: v7x
topology: tpu7x:2x2x1
jax: 0.10.0
libtpu: 0.0.40
codegen_flags: <defaults>
</compile_context>

<pallas_src>
import math

import jax
import jax.numpy as jnp
from jax.experimental import pallas as pl
from jax.experimental.pallas import tpu as pltpu


def _round_up(x, m):
    return ((x + m - 1) // m) * m


def sage_kernel(adj_ref, feat_ref, w_ref, deg_ref, out_ref, acc_ref):
    # adj_ref  : (TM, TK)      bf16 tile of (A + I)   -- rows = this node tile
    # feat_ref : (TK, Fin_p)   bf16 feature K-slab
    # w_ref    : (Fin_p, Fout_p) f32 projection weight (grid-invariant)
    # deg_ref  : (TM, 1)       f32 in-degrees of this node tile (exact)
    # out_ref  : (TM, Fout_p)  f32 output tile
    # acc_ref  : (TM, Fin_p)   f32 accumulator scratch, persists across k steps
    k = pl.program_id(1)

    @pl.when(k == 0)
    def _():
        acc_ref[...] = jnp.zeros_like(acc_ref)

    # (A + I) tile @ feat K-slab: bf16 operands, f32 MXU accumulation.
    acc_ref[...] += jnp.dot(adj_ref[...], feat_ref[...],
                            preferred_element_type=jnp.float32)

    @pl.when(k == pl.num_programs(1) - 1)
    def _():
        # Shared projection:  ((A + I) @ feat) @ W   ==  A @ (feat @ W) + feat @ W
        h = jnp.dot(acc_ref[...], w_ref[...],
                    preferred_element_type=jnp.float32)          # (TM, Fout_p)
        inv = pl.reciprocal(deg_ref[...] + 1.0, approx=True)     # EUP slot, (TM, 1)
        # TODO(synk): activation fixed to ReLU (module takes it as a ctor arg).
        out_ref[...] = jnp.maximum(h * inv, 0.0).astype(out_ref.dtype)


def sage_mean_conv_forward(feat, adj, W, *, tile_m=256, tile_k=512,
                           vmem_limit_bytes=48 * 1024 * 1024):
    """Pallas forward of SAGEMeanConv.

    feat : (N, F_in) float32 node features
    adj  : (N, N)    float32 {0,1} in-adjacency  (adj[i, j] = 1  iff edge j -> i)
    W    : (F_in, F_out) float32
    returns (N, F_out) float32
    """
    N, Fin = feat.shape
    Fout = W.shape[1]
    assert adj.shape == (N, N)

    # ---- tile sizing -------------------------------------------------------
    # Row tile: large (amortize grid-step overhead, fill MXU in M) but keep
    # >= ~4 row tiles so the "parallel" axis can feed both v7x TensorCores.
    TM = min(tile_m, max(8, _round_up((N + 3) // 4, 8)))
    # Contraction (node) tile: multiple of 128 keeps the MXU K feed lane-aligned.
    TK = min(tile_k, _round_up(N, 128))
    Np = _round_up(N, math.lcm(TM, TK))
    Fin_p = _round_up(Fin, 128)
    Fout_p = _round_up(Fout, 128)

    # ---- host-side prep ----------------------------------------------------
    # Exact f32 in-degrees BEFORE any low-precision cast of the adjacency.
    degs = jnp.sum(adj, axis=1, keepdims=True).astype(jnp.float32)      # (N, 1)
    # Fold the self term into the aggregation operator: (A @ h + h) == (A + I) @ h.
    adj_aug = adj.astype(jnp.float32) + jnp.eye(N, dtype=jnp.float32)

    pad_n = Np - N
    adj_p = jnp.pad(adj_aug, ((0, pad_n), (0, pad_n))).astype(jnp.bfloat16)
    feat_p = jnp.pad(feat, ((0, pad_n), (0, Fin_p - Fin))).astype(jnp.bfloat16)
    W_p = jnp.pad(W, ((0, Fin_p - Fin), (0, Fout_p - Fout))).astype(jnp.float32)
    degs_p = jnp.pad(degs, ((0, pad_n), (0, 0)))                         # (Np, 1) f32

    grid = (Np // TM, Np // TK)

    flops = 2 * Np * Np * Fin_p + 2 * Np * Fin_p * Fout_p + 2 * Np * Fout_p
    bytes_accessed = (Np * Np * 2                       # bf16 adjacency (dominant)
                      + (Np // TM) * Np * Fin_p * 2     # bf16 feat re-stream per row tile
                      + Fin_p * Fout_p * 4 + Np * 4     # W + degrees
                      + Np * Fout_p * 4)                # output

    out_p = pl.pallas_call(
        sage_kernel,
        out_shape=jax.ShapeDtypeStruct((Np, Fout_p), jnp.float32),
        grid_spec=pltpu.PrefetchScalarGridSpec(
            num_scalar_prefetch=0,
            grid=grid,
            in_specs=[
                pl.BlockSpec((TM, TK), lambda i, k: (i, k)),         # (A + I) tile
                pl.BlockSpec((TK, Fin_p), lambda i, k: (k, 0)),      # feat K-slab
                pl.BlockSpec((Fin_p, Fout_p), lambda i, k: (0, 0)),  # W (grid-invariant)
                pl.BlockSpec((TM, 1), lambda i, k: (i, 0)),          # in-degrees
            ],
            out_specs=pl.BlockSpec((TM, Fout_p), lambda i, k: (i, 0)),
            scratch_shapes=[pltpu.VMEM((TM, Fin_p), jnp.float32)],
        ),
        compiler_params=pltpu.CompilerParams(
            dimension_semantics=("parallel", "arbitrary"),
            vmem_limit_bytes=vmem_limit_bytes,
        ),
        cost_estimate=pl.CostEstimate(
            flops=flops, transcendentals=Np, bytes_accessed=bytes_accessed),
    )(adj_p, feat_p, W_p, degs_p)

    return out_p[:N, :Fout]


if __name__ == "__main__":
    # Small, deterministic shapes consistent with SAGEMeanConv(g, in_feats, out_feats, relu)
    N = 256       # number of nodes
    Fin = 128     # in_feats
    Fout = 72     # out_feats (not a multiple of 128 -> exercises output padding)

    key = jax.random.PRNGKey(0)
    k_adj, k_feat, k_w = jax.random.split(key, 3)

    # Random directed graph, ~10% density.  adj[i, j] = 1 iff there is an edge j -> i,
    # so adj @ h sums messages over in-neighbors and adj.sum(axis=1) = in_degrees.
    adj = (jax.random.uniform(k_adj, (N, N)) < 0.1).astype(jnp.float32)
    feat = jax.random.normal(k_feat, (N, Fin), dtype=jnp.float32)
    W = jax.random.normal(k_w, (Fin, Fout), dtype=jnp.float32)   # torch.randn equivalent

    out = sage_mean_conv_forward(feat, adj, W)
    out = jax.block_until_ready(out)

    # Pure-JAX f32 reference following the PyTorch module exactly.
    h_self = feat @ W
    h_neigh = adj @ h_self
    degs = jnp.sum(adj, axis=1, keepdims=True)
    ref = jnp.maximum((h_neigh + h_self) / (degs + 1.0), 0.0)

    assert out.shape == (N, Fout)
    # bf16 feature/adjacency operands + approx reciprocal -> tolerance sized for bf16.
    assert jnp.allclose(out, ref, atol=5e-2, rtol=1e-2), \
        float(jnp.max(jnp.abs(out - ref)))

    print("KERNEL_OK")
</pallas_src>

<mosaic_0001>
module attributes {stable_mosaic.version = 11 : i64} {
  func.func @sage_kernel(%arg0: i32, %arg1: i32, %arg2: memref<64x256xbf16, #tpu.memory_space<vmem>>, %arg3: memref<256x128xbf16, #tpu.memory_space<vmem>>, %arg4: memref<128x128xf32, #tpu.memory_space<vmem>>, %arg5: memref<64x1xf32, #tpu.memory_space<vmem>>, %arg6: memref<64x128xf32, #tpu.memory_space<vmem>>, %arg7: memref<64x128xf32, #tpu.memory_space<vmem>>) attributes {dimension_semantics = [#tpu.dimension_semantics<parallel>, #tpu.dimension_semantics<arbitrary>], iteration_bounds = array<i64: 4, 1>, scalar_prefetch = 0 : i64, scratch_operands = 1 : i64, tpu.core_type = #tpu.core_type<tc>, window_params = [{transform_indices = @transform_0, window_bounds = array<i64: 64, 256>}, {transform_indices = @transform_1, window_bounds = array<i64: 256, 128>}, {pipeline_mode = #tpu.pipeline_mode<synchronous>, transform_indices = @transform_2, window_bounds = array<i64: 128, 128>}, {transform_indices = @transform_3, window_bounds = array<i64: 64, 1>}, {transform_indices = @transform_4, window_bounds = array<i64: 64, 128>}]} {
    %c0_i32 = arith.constant 0 : i32
    %0 = arith.cmpi eq, %arg1, %c0_i32 : i32
    %1 = arith.extui %0 : i1 to i32
    %c0_i32_0 = arith.constant 0 : i32
    %2 = arith.cmpi ne, %1, %c0_i32_0 : i32
    scf.if %2 {
      %cst_10 = arith.constant 0.000000e+00 : f32
      %12 = vector.broadcast %cst_10 : f32 to vector<64x128xf32>
      %c0_11 = arith.constant 0 : index
      %c0_12 = arith.constant 0 : index
      %13 = vector.load %arg7[%c0_11, %c0_12] : memref<64x128xf32, #tpu.memory_space<vmem>>, vector<64x128xf32>
      tpu.vector_store %arg7[%c0_11, %c0_12], %12 {strides = array<i32>} : memref<64x128xf32, #tpu.memory_space<vmem>>, vector<64x128xf32>,
    } else {
    }
    %c0 = arith.constant 0 : index
    %c0_1 = arith.constant 0 : index
    %3 = vector.load %arg7[%c0, %c0_1] : memref<64x128xf32, #tpu.memory_space<vmem>>, vector<64x128xf32>
    %c0_2 = arith.constant 0 : index
    %c0_3 = arith.constant 0 : index
    %4 = vector.load %arg2[%c0_2, %c0_3] : memref<64x256xbf16, #tpu.memory_space<vmem>>, vector<64x256xbf16>
    %c0_4 = arith.constant 0 : index
    %c0_5 = arith.constant 0 : index
    %5 = vector.load %arg3[%c0_4, %c0_5] : memref<256x128xbf16, #tpu.memory_space<vmem>>, vector<256x128xbf16>
    %cst = arith.constant dense<0.000000e+00> : vector<64x128xf32>
    %6 = tpu.matmul %4, %5, %cst {dimension_numbers = #tpu.dot_dimension_numbers<[1], [0], [0], [1], [0, 0, 1, 1], [], []>} : vector<64x256xbf16>, vector<256x128xbf16>, vector<64x128xf32> -> vector<64x128xf32>
    %7 = arith.addf %3, %6 : vector<64x128xf32>
    %c0_6 = arith.constant 0 : index
    %c0_7 = arith.constant 0 : index
    %8 = vector.load %arg7[%c0_6, %c0_7] : memref<64x128xf32, #tpu.memory_space<vmem>>, vector<64x128xf32>
    tpu.vector_store %arg7[%c0_6, %c0_7], %7 {strides = array<i32>} : memref<64x128xf32, #tpu.memory_space<vmem>>, vector<64x128xf32>,
    %c0_i32_8 = arith.constant 0 : i32
    %9 = arith.cmpi eq, %arg1, %c0_i32_8 : i32
    %10 = arith.extui %9 : i1 to i32
    %c0_i32_9 = arith.constant 0 : i32
    %11 = arith.cmpi ne, %10, %c0_i32_9 : i32
    scf.if %11 {
      %c0_10 = arith.constant 0 : index
      %c0_11 = arith.constant 0 : index
      %12 = vector.load %arg7[%c0_10, %c0_11] : memref<64x128xf32, #tpu.memory_space<vmem>>, vector<64x128xf32>
      %c0_12 = arith.constant 0 : index
      %c0_13 = arith.constant 0 : index
      %13 = vector.load %arg4[%c0_12, %c0_13] : memref<128x128xf32, #tpu.memory_space<vmem>>, vector<128x128xf32>
      %cst_14 = arith.constant dense<0.000000e+00> : vector<64x128xf32>
      %14 = tpu.matmul %12, %13, %cst_14 {dimension_numbers = #tpu.dot_dimension_numbers<[1], [0], [0], [1], [0, 0, 1, 1], [], []>} : vector<64x128xf32>, vector<128x128xf32>, vector<64x128xf32> -> vector<64x128xf32>
      %c0_15 = arith.constant 0 : index
      %c0_16 = arith.constant 0 : index
      %15 = vector.load %arg5[%c0_15, %c0_16] : memref<64x1xf32, #tpu.memory_space<vmem>>, vector<64x1xf32>
      %cst_17 = arith.constant 1.000000e+00 : f32
      %16 = vector.broadcast %cst_17 : f32 to vector<64x1xf32>
      %17 = arith.addf %15, %16 : vector<64x1xf32>
      %18 = tpu.reciprocal %17 {approx = true} : vector<64x1xf32> -> vector<64x1xf32>
      %19 = vector.broadcast %18 : vector<64x1xf32> to vector<64x128xf32>
      %20 = arith.mulf %14, %19 : vector<64x128xf32>
      %cst_18 = arith.constant 0.000000e+00 : f32
      %21 = vector.broadcast %cst_18 : f32 to vector<64x128xf32>
      %22 = arith.maximumf %20, %21 : vector<64x128xf32>
      %c0_19 = arith.constant 0 : index
      %c0_20 = arith.constant 0 : index
      %23 = vector.load %arg6[%c0_19, %c0_20] : memref<64x128xf32, #tpu.memory_space<vmem>>, vector<64x128xf32>
      tpu.vector_store %arg6[%c0_19, %c0_20], %22 {strides = array<i32>} : memref<64x128xf32, #tpu.memory_space<vmem>>, vector<64x128xf32>,
    } else {
    }
    return
  }
  func.func @transform_0(%arg0: i32, %arg1: i32) -> (i32, i32) {
    %c0_i32 = arith.constant 0 : i32
    return %arg0, %arg1 : i32, i32
  }
  func.func @transform_1(%arg0: i32, %arg1: i32) -> (i32, i32) {
    %c0_i32 = arith.constant 0 : i32
    %c0_i32_0 = arith.constant 0 : i32
    return %arg1, %c0_i32 : i32, i32
  }
  func.func @transform_2(%arg0: i32, %arg1: i32) -> (i32, i32) {
    %c0_i32 = arith.constant 0 : i32
    %c0_i32_0 = arith.constant 0 : i32
    %c0_i32_1 = arith.constant 0 : i32
    return %c0_i32, %c0_i32_0 : i32, i32
  }
  func.func @transform_3(%arg0: i32, %arg1: i32) -> (i32, i32) {
    %c0_i32 = arith.constant 0 : i32
    %c0_i32_0 = arith.constant 0 : i32
    return %arg0, %c0_i32 : i32, i32
  }
  func.func @transform_4(%arg0: i32, %arg1: i32) -> (i32, i32) {
    %c0_i32 = arith.constant 0 : i32
    %c0_i32_0 = arith.constant 0 : i32
    return %arg0, %c0_i32 : i32, i32
  }
}

</mosaic_0001>

<llo_original>
// kernel: tpu_custom_call.1
$region0: #{tpu_custom_call.1}
  #allocation0 [shape = 'u32[]', space=smem, size = 0x4, offset = 0x4, fixed_abs, tag = 'smem constant byte address 0x4 - core index']
  #allocation1 [shape = 'u32[144,128]{1,0:T(1,128)}', space=vmem, size = 0x12000, scoped, tag = 'internal scratch']
  #allocation2 [shape = 'f32[64,128]{1,0:T(8,128)}', space=vmem, size = 0x8000, scoped, tag = 'scratch operand']
  %s0 = inlined_call_operand.vmem [shape: bf16[256,256], index: 0, kind: input, shape index: {}]
  %s1 = inlined_call_operand.hbm [shape: bf16[256,128], index: 1, kind: input, shape index: {}]
  %s2 = inlined_call_operand.hbm [shape: f32[128,128], index: 2, kind: input, shape index: {}]
  %s3 = inlined_call_operand.vmem [shape: f32[256,1], index: 3, kind: input, shape index: {}]
  %s4 = inlined_call_operand.hbm [shape: f32[256,128], index: 4, kind: output, shape index: {}]
  %s5 = sld [smem:[#allocation0]]
  $region65: #{tpu_custom_call.1} parent=0
    _
  %s7 = ssub.s32 1, %s5
  %s8 = scalar_select 0, %s7, %s5
  $region1: #{tpu_custom_call.1} parent=0
    #allocation3 [shape = 'u8[65536]{0}', space=vmem, size = 0x10000, scoped, tag = 'input window, operand 1, single buffered']
    #allocation4 [shape = 's32[2]{0}', space=sflag, size = 0x8, scoped, tag = 'scoped memory for tpu_custom_call.1']
    #allocation5 [shape = 's32[2]{0}', space=sflag, size = 0x8, scoped, tag = 'scoped memory for tpu_custom_call.1']
    #allocation6 [shape = 'u8[65536]{0}', space=vmem, size = 0x10000, scoped, tag = 'input window, operand 2, single buffered']
    #allocation7 [shape = 's32[1]{0}', space=sflag, size = 0x4, scoped, tag = 'scoped memory for tpu_custom_call.1']
    #allocation8 [shape = 'u8[65536]{0}', space=vmem, size = 0x10000, scoped, tag = 'output window, operand 0']
    %9 = vsyncpa [#allocation4], 0
    %10 = vsyncpa [#allocation7], 0
    %11 = vsyncpa [#allocation5], 0
    %s12 = scalar_lea.sflag [#allocation5], 1
    %13 = vsyncpa %s12, 0
    loop: start=0, step=1, limit=6
    $region2: #{tpu_custom_call.1} parent=1 // loop_pre_header
      _
    $region3: #{tpu_custom_call.1} parent=1 // loop_header
      %s15 = sphi 0, %s19
      %p16 = scmp.ge.s32.totalorder %s15, 6
      %s22 = sphi 0, %s34
      %s23 = sphi 0, %s30
      %s24 = sphi 0, %s22
      %s25 = sphi 0, %s23
      %s26 = sphi 0, %s24
      %s27 = sphi 0, %s25
      %s39 = sphi 0, %s41
      %s42 = sphi 0, %s39
      %s43 = sphi 0, %s42
      %s59 = sphi 0, %s43
      %s65 = sphi 0, %s67
      %s68 = sphi 0, %s65
      %s69 = sphi 0, %s68
      %s85 = sphi 0, %s69
      %s89 = sphi 0, %s89
      %s91 = sphi 0, %s89
      %s92 = sphi 0, %s91
      %s106 = sphi 0, %s92
      %s112 = sphi 0, %s114
      %s115 = sphi 0, %s112
      %s116 = sphi 0, %s115
      %s132 = sphi 0, %s116
      %s138 = sphi 0, %s140
      %s141 = sphi 0, %s138
      %s142 = sphi 0, %s141
      %s158 = sphi 0, %s142
    $region4: #{tpu_custom_call.1} parent=1 // loop_header_branch
      %18 = sbr.rel (%p16) target = $region8
    $region5: #{tpu_custom_call.1} parent=1 // loop_body
      %s20 = ssub.s32 %s15, 1
      %s21 = ssub.s32 %s15, 2
      %s28 = sadd.s32 1, %s23
      %p29 = scmp.ge.s32.totalorder %s28, 1
      %s30 = scalar_select %p29, 0, %s28
      %s31 = sadd.s32 1, %s22
      %s32 = scalar_select %p29, %s31, %s22
      %p33 = scmp.ge.s32.totalorder %s32, 4
      %s34 = scalar_select %p33, 0, %s32
      %s35 = ssub.s32 %s22, %s34
      %s36 = ssub.s32 %s23, %s30
      %s37 = sor.u32 %s35, %s36
      %p38 = scmp.eq.s32.totalorder %s37, 0
      %s40 = sadd.s32 %s39, 1
      %s41 = scalar_select %p38, %s39, %s40
      %p44 = pneg %p38
      %p45 = scmp.eq.s32.totalorder %s15, 3
      %p46 = por %p44, %p45
      %p47 = scmp.ne.s32.totalorder %s39, %s42
      %p48 = scmp.eq.s32.totalorder %s15, 0
      %p49 = por %p47, %p48
      %p50 = scmp.ne.s32.totalorder %s39, %s42
      %p51 = scmp.eq.s32.totalorder %s20, 3
      %p52 = por %p50, %p51
      %p53 = scmp.ne.s32.totalorder %s42, %s43
      %p54 = scmp.eq.s32.totalorder %s20, 0
      %p55 = por %p53, %p54
      %p56 = scmp.ne.s32.totalorder %s42, %s43
      %p57 = scmp.eq.s32.totalorder %s21, 3
      %p58 = por %p56, %p57
      %p60 = scmp.ne.s32.totalorder %s43, %s59
      %p61 = scmp.eq.s32.totalorder %s21, 0
      %p62 = por %p60, %p61
      %s63 = ssub.s32 %s23, %s30
      %p64 = scmp.eq.s32.totalorder %s63, 0
      %s66 = sadd.s32 %s65, 1
      %s67 = scalar_select %p64, %s65, %s66
      %p70 = pneg %p64
      %p71 = scmp.eq.s32.totalorder %s15, 3
      %p72 = por %p70, %p71
      %p73 = scmp.ne.s32.totalorder %s65, %s68
      %p74 = scmp.eq.s32.totalorder %s15, 0
      %p75 = por %p73, %p74
      %p76 = scmp.ne.s32.totalorder %s65, %s68
      %p77 = scmp.eq.s32.totalorder %s20, 3
      %p78 = por %p76, %p77
      %p79 = scmp.ne.s32.totalorder %s68, %s69
      %p80 = scmp.eq.s32.totalorder %s20, 0
      %p81 = por %p79, %p80
      %p82 = scmp.ne.s32.totalorder %s68, %s69
      %p83 = scmp.eq.s32.totalorder %s21, 3
      %p84 = por %p82, %p83
      %p86 = scmp.ne.s32.totalorder %s69, %s85
      %p87 = scmp.eq.s32.totalorder %s21, 0
      %p88 = por %p86, %p87
      %s90 = sadd.s32 %s89, 1
      %p93 = scmp.eq.s32.totalorder %s15, 3
      %p94 = scmp.ne.s32.totalorder %s89, %s91
      %p95 = scmp.eq.s32.totalorder %s15, 0
      %p96 = por %p94, %p95
      %p97 = scmp.ne.s32.totalorder %s89, %s91
      %p98 = scmp.eq.s32.totalorder %s20, 3
      %p99 = por %p97, %p98
      %p100 = scmp.ne.s32.totalorder %s91, %s92
      %p101 = scmp.eq.s32.totalorder %s20, 0
      %p102 = por %p100, %p101
      %p103 = scmp.ne.s32.totalorder %s91, %s92
      %p104 = scmp.eq.s32.totalorder %s21, 3
      %p105 = por %p103, %p104
      %p107 = scmp.ne.s32.totalorder %s92, %s106
      %p108 = scmp.eq.s32.totalorder %s21, 0
      %p109 = por %p107, %p108
      %s110 = ssub.s32 %s22, %s34
      %p111 = scmp.eq.s32.totalorder %s110, 0
      %s113 = sadd.s32 %s112, 1
      %s114 = scalar_select %p111, %s112, %s113
      %p117 = pneg %p111
      %p118 = scmp.eq.s32.totalorder %s15, 3
      %p119 = por %p117, %p118
      %p120 = scmp.ne.s32.totalorder %s112, %s115
      %p121 = scmp.eq.s32.totalorder %s15, 0
      %p122 = por %p120, %p121
      %p123 = scmp.ne.s32.totalorder %s112, %s115
      %p124 = scmp.eq.s32.totalorder %s20, 3
      %p125 = por %p123, %p124
      %p126 = scmp.ne.s32.totalorder %s115, %s116
      %p127 = scmp.eq.s32.totalorder %s20, 0
      %p128 = por %p126, %p127
      %p129 = scmp.ne.s32.totalorder %s115, %s116
      %p130 = scmp.eq.s32.totalorder %s21, 3
      %p131 = por %p129, %p130
      %p133 = scmp.ne.s32.totalorder %s116, %s132
      %p134 = scmp.eq.s32.totalorder %s21, 0
      %p135 = por %p133, %p134
      %s136 = ssub.s32 %s22, %s34
      %p137 = scmp.eq.s32.totalorder %s136, 0
      %s139 = sadd.s32 %s138, 1
      %s140 = scalar_select %p137, %s138, %s139
      %p143 = pneg %p137
      %p144 = scmp.eq.s32.totalorder %s15, 3
      %p145 = por %p143, %p144
      %p146 = scmp.ne.s32.totalorder %s138, %s141
      %p147 = scmp.eq.s32.totalorder %s15, 0
      %p148 = por %p146, %p147
      %p149 = scmp.ne.s32.totalorder %s138, %s141
      %p150 = scmp.eq.s32.totalorder %s20, 3
      %p151 = por %p149, %p150
      %p152 = scmp.ne.s32.totalorder %s141, %s142
      %p153 = scmp.eq.s32.totalorder %s20, 0
      %p154 = por %p152, %p153
      %p155 = scmp.ne.s32.totalorder %s141, %s142
      %p156 = scmp.eq.s32.totalorder %s21, 3
      %p157 = por %p155, %p156
      %p159 = scmp.ne.s32.totalorder %s142, %s158
      %p160 = scmp.eq.s32.totalorder %s21, 0
      %p161 = por %p159, %p160
      %p162 = scmp.le.s32.totalorder 1, %s15
      %p163 = scmp.lt.s32.totalorder %s15, 5
      %p164 = pnand %p162, %p163
      %p165 = pneg %p164
      // Predicated region
      $region9: #{tpu_custom_call.1} parent=5 // pred_check
        _
      $region10: #{tpu_custom_call.1} parent=5 // pred_check_branch
        %167 = sbr.rel (%p164) target = $region12
      $region11: #{tpu_custom_call.1} parent=5 // pred_region
        %s168 = ssub.s32 %s15, 1
        // Predicated region
        $region13: #{tpu_custom_call.1} parent=11 // pred_check
          %p169 = pneg %p81
        $region14: #{tpu_custom_call.1} parent=11 // pred_check_branch
          %171 = sbr.rel (%p169) target = $region16
        $region15: #{tpu_custom_call.1} parent=11 // pred_region
          %s172 = smul.u32 32, %s25
          %s174 = ssub.s32 2048, 2048
          %175 = vsyncadd [#allocation4], %s174
          %s176 = smul.addr %s172, 64
          %s177 = scalar_lea.hbm %s1, %s176
          %s178 = sshll.u32 [#allocation3], 4
          %s179 = int_to_ptr.vmem [resolvable:$true] %s178
          %184 = dma.hbm_to_vmem [thread:$0]  %s177, 2048, %s179, [#allocation4], 64, 64, 4
        $region16: #{tpu_custom_call.1} parent=11 // pred_fallthru
          _
        // Predicated region
        $region17: #{tpu_custom_call.1} parent=11 // pred_check
          %p185 = pneg %p102
        $region18: #{tpu_custom_call.1} parent=11 // pred_check_branch
          %187 = sbr.rel (%p185) target = $region20
        $region19: #{tpu_custom_call.1} parent=11 // pred_region
          %s189 = ssub.s32 2048, 2048
          %190 = vsyncadd [#allocation7], %s189
          %s191 = sshll.u32 [#allocation6], 4
          %s192 = int_to_ptr.vmem [resolvable:$true] %s191
          %197 = dma.hbm_to_vmem [thread:$0]  %s2, 2048, %s192, [#allocation7], 128, 128, 8
        $region20: #{tpu_custom_call.1} parent=11 // pred_fallthru
          _
      $region12: #{tpu_custom_call.1} parent=5 // pred_fallthru
        _
      %p198 = scmp.lt.s32.totalorder %s15, 4
      // Predicated region
      $region21: #{tpu_custom_call.1} parent=5 // pred_check
        %p199 = pneg %p198
      $region22: #{tpu_custom_call.1} parent=5 // pred_check_branch
        %201 = sbr.rel (%p199) target = $region24
      $region23: #{tpu_custom_call.1} parent=5 // pred_region
        // Predicated region
        $region25: #{tpu_custom_call.1} parent=23 // pred_check
          %p202 = pneg %p49
        $region26: #{tpu_custom_call.1} parent=23 // pred_check_branch
          %204 = sbr.rel (%p202) target = $region28
        $region27: #{tpu_custom_call.1} parent=23 // pred_region
          %s205 = smul.u32 8, %s22
          %s206 = smul.u32 2, %s23
          %p207 = scmp.lt.s32.totalorder %s205, 31
          %s208 = scalar_select %p207, %s205, 31
          %p209 = scmp.lt.s32.totalorder %s206, 1
          %s210 = scalar_select %p209, %s206, 1
          %s211 = smul.addr %s208, 2
          %s212 = sadd.s32 %s210, %s211
          %s213 = smul.addr %s212, 4
          %s214 = scalar_lea.vmem %s0, %s213
          %s215 = smul.u32 8, %s22
          %s216 = smul.u32 2, %s23
        $region28: #{tpu_custom_call.1} parent=23 // pred_fallthru
          _
        // Predicated region
        $region29: #{tpu_custom_call.1} parent=23 // pred_check
          %p217 = pneg %p122
        $region30: #{tpu_custom_call.1} parent=23 // pred_check_branch
          %219 = sbr.rel (%p217) target = $region32
        $region31: #{tpu_custom_call.1} parent=23 // pred_region
          %s220 = smul.u32 8, %s22
          %p221 = scmp.lt.s32.totalorder %s220, 31
          %s222 = scalar_select %p221, %s220, 31
          %s223 = smul.addr %s222, 8
          %s224 = scalar_lea.vmem %s3, %s223
          %s225 = smul.u32 8, %s22
        $region32: #{tpu_custom_call.1} parent=23 // pred_fallthru
          _
      $region24: #{tpu_custom_call.1} parent=5 // pred_fallthru
        _
      %p226 = scmp.le.s32.totalorder 1, %s15
      %p227 = scmp.lt.s32.totalorder %s15, 5
      %p228 = pnand %p226, %p227
      %p229 = pneg %p228
      // Predicated region
      $region33: #{tpu_custom_call.1} parent=5 // pred_check
        _
      $region34: #{tpu_custom_call.1} parent=5 // pred_check_branch
        %231 = sbr.rel (%p228) target = $region36
      $region35: #{tpu_custom_call.1} parent=5 // pred_region
        %s232 = ssub.s32 %s15, 1
        // Predicated region
        $region37: #{tpu_custom_call.1} parent=35 // pred_check
          %p233 = pneg %p81
        $region38: #{tpu_custom_call.1} parent=35 // pred_check_branch
          %235 = sbr.rel (%p233) target = $region40
        $region39: #{tpu_custom_call.1} parent=35 // pred_region
          %236 = dma.done [#allocation4], 2048
        $region40: #{tpu_custom_call.1} parent=35 // pred_fallthru
          _
        // Predicated region
        $region41: #{tpu_custom_call.1} parent=35 // pred_check
          %p237 = pneg %p102
        $region42: #{tpu_custom_call.1} parent=35 // pred_check_branch
          %239 = sbr.rel (%p237) target = $region44
        $region43: #{tpu_custom_call.1} parent=35 // pred_region
          %240 = dma.done [#allocation7], 2048
        $region44: #{tpu_custom_call.1} parent=35 // pred_fallthru
          _
        %s241 = smul.u32 8, %s24
        %s242 = smul.u32 2, %s25
        %p243 = scmp.lt.s32.totalorder %s241, 31
        %s244 = scalar_select %p243, %s241, 31
        %p245 = scmp.lt.s32.totalorder %s242, 1
        %s246 = scalar_select %p245, %s242, 1
        %s247 = smul.addr %s244, 2
        %s248 = sadd.s32 %s246, %s247
        %s249 = smul.addr %s248, 4
        %s250 = scalar_lea.vmem %s0, %s249
        %p251 = pneg %p55
        %p252 = pneg %p52
        %p253 = pneg %p81
        %p254 = pneg %p78
        %p255 = pneg %p102
        %p256 = pneg %p99
        %s257 = smul.u32 8, %s24
        %p258 = scmp.lt.s32.totalorder %s257, 31
        %s259 = scalar_select %p258, %s257, 31
        %s260 = smul.addr %s259, 8
        %s261 = scalar_lea.vmem %s3, %s260
        %p262 = pneg %p128
        %p263 = pneg %p125
        %p264 = pneg %p154
        %p265 = pneg %p151
        %s266 = sand.u32 %s141, 1
        %s267 = scalar_lea.sflag [#allocation5], %s266
        %s268 = sand.u32 %s141, 1
        %s269 = smul.addr %s268, 64
        %s270 = scalar_lea.vmem [#allocation8], %s269
        %s271 = smul.u32 8, %s24
        %s272 = smul.u32 2, %s25
        %p273 = scmp.lt.s32.totalorder %s271, 31
        %s274 = scalar_select %p273, %s271, 31
        %p275 = scmp.lt.s32.totalorder %s272, 1
        %s276 = scalar_select %p275, %s272, 1
        %s277 = smul.addr %s274, 2
        %s278 = sadd.s32 %s276, %s277
        %s279 = smul.addr %s278, 4
        %s280 = scalar_lea.vmem %s0, %s279
        %s281 = smul.u32 8, %s24
        %s282 = smul.u32 2, %s25
        %s283 = smul.u32 32, %s25
        %s284 = smul.u32 8, %s24
        %p285 = scmp.lt.s32.totalorder %s284, 31
        %s286 = scalar_select %p285, %s284, 31
        %s287 = smul.addr %s286, 8
        %s288 = scalar_lea.vmem %s3, %s287
        %s289 = smul.u32 8, %s24
        %s290 = smul.u32 8, %s24
        %p292 = scmp.eq.s32.totalorder %s25, 0
        // Predicated region
        $region45: #{tpu_custom_call.1} parent=35 // pred_check
          %p293 = pneg %p292
        $region46: #{tpu_custom_call.1} parent=35 // pred_check_branch
          %295 = sbr.rel (%p293) target = $region48
        $region47: #{tpu_custom_call.1} parent=35 // pred_region
          %296 = vst [vmem:[#allocation2] sm:$0xff] 0.0
          %297 = vst [vmem:[#allocation2 + $0x8] sm:$0xff] 0.0
          %298 = vst [vmem:[#allocation2 + $0x10] sm:$0xff] 0.0
          %299 = vst [vmem:[#allocation2 + $0x18] sm:$0xff] 0.0
          %300 = vst [vmem:[#allocation2 + $0x20] sm:$0xff] 0.0
          %301 = vst [vmem:[#allocation2 + $0x28] sm:$0xff] 0.0
          %302 = vst [vmem:[#allocation2 + $0x30] sm:$0xff] 0.0
          %303 = vst [vmem:[#allocation2 + $0x38] sm:$0xff] 0.0
        $region48: #{tpu_custom_call.1} parent=35 // pred_fallthru
          _
        %v304 = vld [vmem:[#allocation2] sm:$0xff]
        %v305 = vld [vmem:[#allocation2 + $0x8] sm:$0xff]
        %v306 = vld [vmem:[#allocation2 + $0x10] sm:$0xff]
        %v307 = vld [vmem:[#allocation2 + $0x18] sm:$0xff]
        %v308 = vld [vmem:[#allocation2 + $0x20] sm:$0xff]
        %v309 = vld [vmem:[#allocation2 + $0x28] sm:$0xff]
        %v310 = vld [vmem:[#allocation2 + $0x30] sm:$0xff]
        %v311 = vld [vmem:[#allocation2 + $0x38] sm:$0xff]
        %v312 = vld [vmem:[%s280] sm:$0xff]
        %v313 = vld [vmem:[%s280 + $0x8] sm:$0xff]
        %v314 = vld [vmem:[%s280 + $0x10] sm:$0xff]
        %v315 = vld [vmem:[%s280 + $0x18] sm:$0xff]
        %v316 = vld [vmem:[%s280 + $0x20] sm:$0xff]
        %v317 = vld [vmem:[%s280 + $0x28] sm:$0xff]
        %v318 = vld [vmem:[%s280 + $0x30] sm:$0xff]
        %v319 = vld [vmem:[%s280 + $0x38] sm:$0xff]
        %v320 = vld [vmem:[#allocation3] sm:$0xf]
        %v321 = vld [vmem:[#allocation3 + $0x4] sm:$0xf]
        %v322 = vld [vmem:[#allocation3 + $0x8] sm:$0xf]
        %v323 = vld [vmem:[#allocation3 + $0xc] sm:$0xf]
        %v324 = vld [vmem:[#allocation3 + $0x10] sm:$0xf]
        %v325 = vld [vmem:[#allocation3 + $0x14] sm:$0xf]
        %v326 = vld [vmem:[#allocation3 + $0x18] sm:$0xf]
        %v327 = vld [vmem:[#allocation3 + $0x1c] sm:$0xf]
        %v328 = vld [vmem:[#allocation3 + $0x20] sm:$0xf]
        %v329 = vld [vmem:[#allocation3 + $0x24] sm:$0xf]
        %v330 = vld [vmem:[#allocation3 + $0x28] sm:$0xf]
        %v331 = vld [vmem:[#allocation3 + $0x2c] sm:$0xf]
        %v332 = vld [vmem:[#allocation3 + $0x30] sm:$0xf]
        %v333 = vld [vmem:[#allocation3 + $0x34] sm:$0xf]
        %v334 = vld [vmem:[#allocation3 + $0x38] sm:$0xf]
        %v335 = vld [vmem:[#allocation3 + $0x3c] sm:$0xf]
        %v336 = vld [vmem:[#allocation3 + $0x40] sm:$0xf]
        %v337 = vld [vmem:[#allocation3 + $0x44] sm:$0xf]
        %v338 = vld [vmem:[#allocation3 + $0x48] sm:$0xf]
        %v339 = vld [vmem:[#allocation3 + $0x4c] sm:$0xf]
        %v340 = vld [vmem:[#allocation3 + $0x50] sm:$0xf]
        %v341 = vld [vmem:[#allocation3 + $0x54] sm:$0xf]
        %v342 = vld [vmem:[#allocation3 + $0x58] sm:$0xf]
        %v343 = vld [vmem:[#allocation3 + $0x5c] sm:$0xf]
        %v344 = vld [vmem:[#allocation3 + $0x60] sm:$0xf]
        %v345 = vld [vmem:[#allocation3 + $0x64] sm:$0xf]
        %v346 = vld [vmem:[#allocation3 + $0x68] sm:$0xf]
        %v347 = vld [vmem:[#allocation3 + $0x6c] sm:$0xf]
        %v348 = vld [vmem:[#allocation3 + $0x70] sm:$0xf]
        %v349 = vld [vmem:[#allocation3 + $0x74] sm:$0xf]
        %v350 = vld [vmem:[#allocation3 + $0x78] sm:$0xf]
        %v351 = vld [vmem:[#allocation3 + $0x7c] sm:$0xf]
        %v360 = vunpack.c.l.b16 %v312
        %v361 = vunpack.c.h.b16 %v312
        %v362 = vunpack.c.l.b16 %v313
        %v363 = vunpack.c.h.b16 %v313
        %v364 = vunpack.c.l.b16 %v314
        %v365 = vunpack.c.h.b16 %v314
        %v366 = vunpack.c.l.b16 %v315
        %v367 = vunpack.c.h.b16 %v315
        %v368 = vunpack.c.l.b16 %v316
        %v369 = vunpack.c.h.b16 %v316
        %v370 = vunpack.c.l.b16 %v317
        %v371 = vunpack.c.h.b16 %v317
        %v372 = vunpack.c.l.b16 %v318
        %v373 = vunpack.c.h.b16 %v318
        %v374 = vunpack.c.l.b16 %v319
        %v375 = vunpack.c.h.b16 %v319
        %v376 = vpack.c.b16 %v362, %v360
        %v377 = vpack.c.b16 %v363, %v361
        %v378 = vpack.c.b16 %v366, %v364
        %v379 = vpack.c.b16 %v367, %v365
        %v380 = vpack.c.b16 %v370, %v368
        %v381 = vpack.c.b16 %v371, %v369
        %v382 = vpack.c.b16 %v374, %v372
        %v383 = vpack.c.b16 %v375, %v373
        %v424 = vunpack.c.l.b16 %v320
        %v425 = vunpack.c.l.b16 %v321
        %v426 = vunpack.c.l.b16 %v322
        %v427 = vunpack.c.l.b16 %v323
        %v428 = vunpack.c.l.b16 %v324
        %v429 = vunpack.c.l.b16 %v325
        %v430 = vunpack.c.l.b16 %v326
        %v431 = vunpack.c.l.b16 %v327
        %v432 = vunpack.c.l.b16 %v328
        %v433 = vunpack.c.l.b16 %v329
        %v434 = vunpack.c.l.b16 %v330
        %v435 = vunpack.c.l.b16 %v331
        %v436 = vunpack.c.l.b16 %v332
        %v437 = vunpack.c.l.b16 %v333
        %v438 = vunpack.c.l.b16 %v334
        %v439 = vunpack.c.l.b16 %v335
        %v440 = vunpack.c.l.b16 %v336
        %v441 = vunpack.c.l.b16 %v337
        %v442 = vunpack.c.l.b16 %v338
        %v443 = vunpack.c.l.b16 %v339
        %v444 = vunpack.c.l.b16 %v340
        %v445 = vunpack.c.l.b16 %v341
        %v446 = vunpack.c.l.b16 %v342
        %v447 = vunpack.c.l.b16 %v343
        %v448 = vunpack.c.l.b16 %v344
        %v449 = vunpack.c.l.b16 %v345
        %v450 = vunpack.c.l.b16 %v346
        %v451 = vunpack.c.l.b16 %v347
        %v452 = vunpack.c.l.b16 %v348
        %v453 = vunpack.c.l.b16 %v349
        %v454 = vunpack.c.l.b16 %v350
        %v455 = vunpack.c.l.b16 %v351
        %v456 = vpack.c.b16 %v425, %v424
        %v457 = vpack.c.b16 %v427, %v426
        %v458 = vpack.c.b16 %v429, %v428
        %v459 = vpack.c.b16 %v431, %v430
        %v460 = vpack.c.b16 %v433, %v432
        %v461 = vpack.c.b16 %v435, %v434
        %v462 = vpack.c.b16 %v437, %v436
        %v463 = vpack.c.b16 %v439, %v438
        %v464 = vpack.c.b16 %v441, %v440
        %v465 = vpack.c.b16 %v443, %v442
        %v466 = vpack.c.b16 %v445, %v444
        %v467 = vpack.c.b16 %v447, %v446
        %v468 = vpack.c.b16 %v449, %v448
        %v469 = vpack.c.b16 %v451, %v450
        %v470 = vpack.c.b16 %v453, %v452
        %v471 = vpack.c.b16 %v455, %v454
        %488 = vmatprep.subr.bf16.mxu0 0
        %489 = vmatpush1.bf16.msra.mxu0 %v456
        %490 = vmatprep.subr.bf16.mxu0 0
        %491 = vmatpush1.bf16.msra.mxu0 %v457
        %492 = vmatprep.subr.bf16.mxu0 0
        %493 = vmatpush1.bf16.msra.mxu0 %v458
        %494 = vmatprep.subr.bf16.mxu0 0
        %495 = vmatpush1.bf16.msra.mxu0 %v459
        %496 = vmatprep.subr.bf16.mxu0 0
        %497 = vmatpush1.bf16.msra.mxu0 %v460
        %498 = vmatprep.subr.bf16.mxu0 0
        %499 = vmatpush1.bf16.msra.mxu0 %v461
        %500 = vmatprep.subr.bf16.mxu0 0
        %501 = vmatpush1.bf16.msra.mxu0 %v462
        %502 = vmatprep.subr.bf16.mxu0 0
        %503 = vmatpush1.bf16.msra.mxu0 %v463
        %504 = vmatprep.subr.bf16.mxu0 0
        %505 = vmatpush1.bf16.msra.mxu0 %v464
        %506 = vmatprep.subr.bf16.mxu0 0
        %507 = vmatpush1.bf16.msra.mxu0 %v465
        %508 = vmatprep.subr.bf16.mxu0 0
        %509 = vmatpush1.bf16.msra.mxu0 %v466
        %510 = vmatprep.subr.bf16.mxu0 0
        %511 = vmatpush1.bf16.msra.mxu0 %v467
        %512 = vmatprep.subr.bf16.mxu0 0
        %513 = vmatpush1.bf16.msra.mxu0 %v468
        %514 = vmatprep.subr.bf16.mxu0 0
        %515 = vmatpush1.bf16.msra.mxu0 %v469
        %516 = vmatprep.subr.bf16.mxu0 0
        %517 = vmatpush1.bf16.msra.mxu0 %v470
        %518 = vmatprep.subr.bf16.mxu0 0
        %519 = vmatpush1.bf16.msra.mxu0 %v471
        %520 = vmatprep.mubr.bf16.mxu0 %v377
        %521 = vmatmul.mubr.bf16.gmra.mrb[0].mxu0 %v376
        %v522 = vpop.f32.mrb[0].mxu0
        %v523 = vadd.f32 0.0, %v522
        %v524 = vpop.f32.mrb[0].mxu0
        %v525 = vpop.f32.mrb[0].mxu0
        %v526 = vadd.f32 0.0, %v525
        %v527 = vpop.f32.mrb[0].mxu0
        %528 = vmatprep.mubr.bf16.mxu0 %v379
        %529 = vmatmul.mubr.bf16.gmra.mrb[0].mxu0 %v378
        %v530 = vpop.f32.mrb[0].mxu0
        %v531 = vadd.f32 0.0, %v530
        %v532 = vpop.f32.mrb[0].mxu0
        %v533 = vpop.f32.mrb[0].mxu0
        %v534 = vadd.f32 0.0, %v533
        %v535 = vpop.f32.mrb[0].mxu0
        %536 = vmatprep.mubr.bf16.mxu0 %v381
        %537 = vmatmul.mubr.bf16.gmra.mrb[0].mxu0 %v380
        %v538 = vpop.f32.mrb[0].mxu0
        %v539 = vadd.f32 0.0, %v538
        %v540 = vpop.f32.mrb[0].mxu0
        %v541 = vpop.f32.mrb[0].mxu0
        %v542 = vadd.f32 0.0, %v541
        %v543 = vpop.f32.mrb[0].mxu0
        %544 = vmatprep.mubr.bf16.mxu0 %v383
        %545 = vmatmul.mubr.bf16.gmra.mrb[0].mxu0 %v382
        %v546 = vpop.f32.mrb[0].mxu0
        %v547 = vadd.f32 0.0, %v546
        %v548 = vpop.f32.mrb[0].mxu0
        %v549 = vpop.f32.mrb[0].mxu0
        %v550 = vadd.f32 0.0, %v549
        %v551 = vpop.f32.mrb[0].mxu0
        %552 = vdwg.mxu0
        %v553 = vadd.f32 %v304, %v523
        %v554 = vadd.f32 %v305, %v526
        %v555 = vadd.f32 %v306, %v531
        %v556 = vadd.f32 %v307, %v534
        %v557 = vadd.f32 %v308, %v539
        %v558 = vadd.f32 %v309, %v542
        %v559 = vadd.f32 %v310, %v547
        %v560 = vadd.f32 %v311, %v550
        %561 = vst [vmem:[#allocation2] sm:$0xff] %v553
        %562 = vst [vmem:[#allocation2 + $0x8] sm:$0xff] %v554
        %563 = vst [vmem:[#allocation2 + $0x10] sm:$0xff] %v555
        %564 = vst [vmem:[#allocation2 + $0x18] sm:$0xff] %v556
        %565 = vst [vmem:[#allocation2 + $0x20] sm:$0xff] %v557
        %566 = vst [vmem:[#allocation2 + $0x28] sm:$0xff] %v558
        %567 = vst [vmem:[#allocation2 + $0x30] sm:$0xff] %v559
        %568 = vst [vmem:[#allocation2 + $0x38] sm:$0xff] %v560
        // Predicated region
        $region49: #{tpu_custom_call.1} parent=35 // pred_check
          %p569 = pneg %p292
        $region50: #{tpu_custom_call.1} parent=35 // pred_check_branch
          %571 = sbr.rel (%p569) target = $region52
        $region51: #{tpu_custom_call.1} parent=35 // pred_region
          %v572 = vld [vmem:[#allocation2] sm:$0xff]
          %v573 = vld [vmem:[#allocation2 + $0x8] sm:$0xff]
          %v574 = vld [vmem:[#allocation2 + $0x10] sm:$0xff]
          %v575 = vld [vmem:[#allocation2 + $0x18] sm:$0xff]
          %v576 = vld [vmem:[#allocation2 + $0x20] sm:$0xff]
          %v577 = vld [vmem:[#allocation2 + $0x28] sm:$0xff]
          %v578 = vld [vmem:[#allocation2 + $0x30] sm:$0xff]
          %v579 = vld [vmem:[#allocation2 + $0x38] sm:$0xff]
          %v580 = vld [vmem:[#allocation6] sm:$0xff]
          %v581 = vld [vmem:[#allocation6 + $0x8] sm:$0xff]
          %v582 = vld [vmem:[#allocation6 + $0x10] sm:$0xff]
          %v583 = vld [vmem:[#allocation6 + $0x18] sm:$0xff]
          %v584 = vld [vmem:[#allocation6 + $0x20] sm:$0xff]
          %v585 = vld [vmem:[#allocation6 + $0x28] sm:$0xff]
          %v586 = vld [vmem:[#allocation6 + $0x30] sm:$0xff]
          %v587 = vld [vmem:[#allocation6 + $0x38] sm:$0xff]
          %v588 = vld [vmem:[#allocation6 + $0x40] sm:$0xff]
          %v589 = vld [vmem:[#allocation6 + $0x48] sm:$0xff]
          %v590 = vld [vmem:[#allocation6 + $0x50] sm:$0xff]
          %v591 = vld [vmem:[#allocation6 + $0x58] sm:$0xff]
          %v592 = vld [vmem:[#allocation6 + $0x60] sm:$0xff]
          %v593 = vld [vmem:[#allocation6 + $0x68] sm:$0xff]
          %v594 = vld [vmem:[#allocation6 + $0x70] sm:$0xff]
          %v595 = vld [vmem:[#allocation6 + $0x78] sm:$0xff]
          %596 = vmatprep.subr.mxu0 0.0
          %597 = vmatpush1.msra.mxu0 %v580
          %598 = vmatprep.subr.mxu0 0.0
          %599 = vmatpush1.msra.mxu0 %v581
          %600 = vmatprep.subr.mxu0 0.0
          %601 = vmatpush1.msra.mxu0 %v582
          %602 = vmatprep.subr.mxu0 0.0
          %603 = vmatpush1.msra.mxu0 %v583
          %604 = vmatprep.subr.mxu0 0.0
          %605 = vmatpush1.msra.mxu0 %v584
          %606 = vmatprep.subr.mxu0 0.0
          %607 = vmatpush1.msra.mxu0 %v585
          %608 = vmatprep.subr.mxu0 0.0
          %609 = vmatpush1.msra.mxu0 %v586
          %610 = vmatprep.subr.mxu0 0.0
          %611 = vmatpush1.msra.mxu0 %v587
          %612 = vmatprep.subr.mxu0 0.0
          %613 = vmatpush1.msra.mxu0 %v588
          %614 = vmatprep.subr.mxu0 0.0
          %615 = vmatpush1.msra.mxu0 %v589
          %616 = vmatprep.subr.mxu0 0.0
          %617 = vmatpush1.msra.mxu0 %v590
          %618 = vmatprep.subr.mxu0 0.0
          %619 = vmatpush1.msra.mxu0 %v591
          %620 = vmatprep.subr.mxu0 0.0
          %621 = vmatpush1.msra.mxu0 %v592
          %622 = vmatprep.subr.mxu0 0.0
          %623 = vmatpush1.msra.mxu0 %v593
          %624 = vmatprep.subr.mxu0 0.0
          %625 = vmatpush1.msra.mxu0 %v594
          %626 = vmatprep.subr.mxu0 0.0
          %627 = vmatpush1.msra.mxu0 %v595
          %628 = vmatprep.subr.mxu0 0.0
          %629 = vmatpush1.msra.mxu0 0.0
          %630 = vmatprep.subr.mxu0 0.0
          %631 = vmatpush1.msra.mxu0 0.0
          %632 = vmatprep.subr.mxu0 0.0
          %633 = vmatpush1.msra.mxu0 0.0
          %634 = vmatprep.subr.mxu0 0.0
          %635 = vmatpush1.msra.mxu0 0.0
          %636 = vmatprep.subr.mxu0 0.0
          %637 = vmatpush1.msra.mxu0 0.0
          %638 = vmatprep.subr.mxu0 0.0
          %639 = vmatpush1.msra.mxu0 0.0
          %640 = vmatprep.subr.mxu0 0.0
          %641 = vmatpush1.msra.mxu0 0.0
          %642 = vmatprep.subr.mxu0 0.0
          %643 = vmatpush1.msra.mxu0 0.0
          %644 = vmatprep.subr.mxu0 0.0
          %645 = vmatpush1.msra.mxu0 0.0
          %646 = vmatprep.subr.mxu0 0.0
          %647 = vmatpush1.msra.mxu0 0.0
          %648 = vmatprep.subr.mxu0 0.0
          %649 = vmatpush1.msra.mxu0 0.0
          %650 = vmatprep.subr.mxu0 0.0
          %651 = vmatpush1.msra.mxu0 0.0
          %652 = vmatprep.subr.mxu0 0.0
          %653 = vmatpush1.msra.mxu0 0.0
          %654 = vmatprep.subr.mxu0 0.0
          %655 = vmatpush1.msra.mxu0 0.0
          %656 = vmatprep.subr.mxu0 0.0
          %657 = vmatpush1.msra.mxu0 0.0
          %658 = vmatprep.subr.mxu0 0.0
          %659 = vmatpush1.msra.mxu0 0.0
          %660 = vmatprep.mubr.f32.mxu0 0.0
          %661 = vmatmul.mubr.f32.gmra.mrb[0].mxu0 %v572
          %v662 = vpop.f32.mrb[0].mxu0
          %v663 = vadd.f32 0.0, %v662
          %v664 = vpop.f32.mrb[0].mxu0
          %665 = vmatprep.mubr.f32.mxu0 0.0
          %666 = vmatmul.mubr.f32.gmra.mrb[0].mxu0 %v573
          %v667 = vpop.f32.mrb[0].mxu0
          %v668 = vadd.f32 0.0, %v667
          %v669 = vpop.f32.mrb[0].mxu0
          %670 = vmatprep.mubr.f32.mxu0 0.0
          %671 = vmatmul.mubr.f32.gmra.mrb[0].mxu0 %v574
          %v672 = vpop.f32.mrb[0].mxu0
          %v673 = vadd.f32 0.0, %v672
          %v674 = vpop.f32.mrb[0].mxu0
          %675 = vmatprep.mubr.f32.mxu0 0.0
          %676 = vmatmul.mubr.f32.gmra.mrb[0].mxu0 %v575
          %v677 = vpop.f32.mrb[0].mxu0
          %v678 = vadd.f32 0.0, %v677
          %v679 = vpop.f32.mrb[0].mxu0
          %680 = vmatprep.mubr.f32.mxu0 0.0
          %681 = vmatmul.mubr.f32.gmra.mrb[0].mxu0 %v576
          %v682 = vpop.f32.mrb[0].mxu0
          %v683 = vadd.f32 0.0, %v682
          %v684 = vpop.f32.mrb[0].mxu0
          %685 = vmatprep.mubr.f32.mxu0 0.0
          %686 = vmatmul.mubr.f32.gmra.mrb[0].mxu0 %v577
          %v687 = vpop.f32.mrb[0].mxu0
          %v688 = vadd.f32 0.0, %v687
          %v689 = vpop.f32.mrb[0].mxu0
          %690 = vmatprep.mubr.f32.mxu0 0.0
          %691 = vmatmul.mubr.f32.gmra.mrb[0].mxu0 %v578
          %v692 = vpop.f32.mrb[0].mxu0
          %v693 = vadd.f32 0.0, %v692
          %v694 = vpop.f32.mrb[0].mxu0
          %695 = vmatprep.mubr.f32.mxu0 0.0
          %696 = vmatmul.mubr.f32.gmra.mrb[0].mxu0 %v579
          %v697 = vpop.f32.mrb[0].mxu0
          %v698 = vadd.f32 0.0, %v697
          %v699 = vpop.f32.mrb[0].mxu0
          %700 = vdwg.mxu0
          %v701 = vld [vmem:[%s288] sm:$0xff]
          %v702 = vld [vmem:[%s288 + $0x8] sm:$0xff]
          %v703 = vld [vmem:[%s288 + $0x10] sm:$0xff]
          %v704 = vld [vmem:[%s288 + $0x18] sm:$0xff]
          %v705 = vld [vmem:[%s288 + $0x20] sm:$0xff]
          %v706 = vld [vmem:[%s288 + $0x28] sm:$0xff]
          %v707 = vld [vmem:[%s288 + $0x30] sm:$0xff]
          %v708 = vld [vmem:[%s288 + $0x38] sm:$0xff]
          %v709 = vadd.f32 %v701, 1.0
          %v710 = vadd.f32 %v702, 1.0
          %v711 = vadd.f32 %v703, 1.0
          %v712 = vadd.f32 %v704, 1.0
          %v713 = vadd.f32 %v705, 1.0
          %v714 = vadd.f32 %v706, 1.0
          %v715 = vadd.f32 %v707, 1.0
          %v716 = vadd.f32 %v708, 1.0
          %v717 = vrcp.pop %v709
          %v718 = vrcp.pop %v710
          %v719 = vrcp.pop %v711
          %v720 = vrcp.pop %v712
          %v721 = vrcp.pop %v713
          %v722 = vrcp.pop %v714
          %v723 = vrcp.pop %v715
          %v724 = vrcp.pop %v716
          %726 = vset.pattern.permute.xlu0 0
          %727 = vperm.xlu0 %726, %v717
          %v728 = vpop.permute.xlu0 %727
          %731 = vset.pattern.permute.xlu0 0
          %732 = vperm.xlu0 %731, %v718
          %v733 = vpop.permute.xlu0 %732
          %736 = vset.pattern.permute.xlu0 0
          %737 = vperm.xlu0 %736, %v719
          %v738 = vpop.permute.xlu0 %737
          %741 = vset.pattern.permute.xlu0 0
          %742 = vperm.xlu0 %741, %v720
          %v743 = vpop.permute.xlu0 %742
          %746 = vset.pattern.permute.xlu0 0
          %747 = vperm.xlu0 %746, %v721
          %v748 = vpop.permute.xlu0 %747
          %751 = vset.pattern.permute.xlu0 0
          %752 = vperm.xlu0 %751, %v722
          %v753 = vpop.permute.xlu0 %752
          %756 = vset.pattern.permute.xlu0 0
          %757 = vperm.xlu0 %756, %v723
          %v758 = vpop.permute.xlu0 %757
          %761 = vset.pattern.permute.xlu0 0
          %762 = vperm.xlu0 %761, %v724
          %v763 = vpop.permute.xlu0 %762
          %v765 = vmul.f32 %v663, %v728
          %v766 = vmul.f32 %v668, %v733
          %v767 = vmul.f32 %v673, %v738
          %v768 = vmul.f32 %v678, %v743
          %v769 = vmul.f32 %v683, %v748
          %v770 = vmul.f32 %v688, %v753
          %v771 = vmul.f32 %v693, %v758
          %v772 = vmul.f32 %v698, %v763
          %v773 = vmax.f32 %v765, 0.0
          %v774 = vmax.f32 %v766, 0.0
          %v775 = vmax.f32 %v767, 0.0
          %v776 = vmax.f32 %v768, 0.0
          %v777 = vmax.f32 %v769, 0.0
          %v778 = vmax.f32 %v770, 0.0
          %v779 = vmax.f32 %v771, 0.0
          %v780 = vmax.f32 %v772, 0.0
          %781 = vst [vmem:[%s270] sm:$0xff] %v773
          %782 = vst [vmem:[%s270 + $0x8] sm:$0xff] %v774
          %783 = vst [vmem:[%s270 + $0x10] sm:$0xff] %v775
          %784 = vst [vmem:[%s270 + $0x18] sm:$0xff] %v776
          %785 = vst [vmem:[%s270 + $0x20] sm:$0xff] %v777
          %786 = vst [vmem:[%s270 + $0x28] sm:$0xff] %v778
          %787 = vst [vmem:[%s270 + $0x30] sm:$0xff] %v779
          %788 = vst [vmem:[%s270 + $0x38] sm:$0xff] %v780
        $region52: #{tpu_custom_call.1} parent=35 // pred_fallthru
          _
        %s789 = sand.u32 %s141, 1
        %s790 = scalar_lea.sflag [#allocation5], %s789
        %s791 = sand.u32 %s141, 1
        %s792 = smul.addr %s791, 64
        %s793 = scalar_lea.vmem [#allocation8], %s792
        // Predicated region
        $region53: #{tpu_custom_call.1} parent=35 // pred_check
          %p794 = pneg %p151
        $region54: #{tpu_custom_call.1} parent=35 // pred_check_branch
          %796 = sbr.rel (%p794) target = $region56
        $region55: #{tpu_custom_call.1} parent=35 // pred_region
          %s797 = smul.u32 8, %s24
          %s799 = ssub.s32 1024, 1024
          %800 = vsyncadd %s790, %s799
          %s801 = smul.addr %s797, 128
          %s802 = scalar_lea.hbm %s4, %s801
          %s803 = sshll.u32 %s793, 4
          %s804 = int_to_ptr.vmem [resolvable:$true] %s803
          %809 = dma.vmem_to_hbm [thread:$0]  %s804, 1024, %s802, %s790, 128, 128, 8
        $region56: #{tpu_custom_call.1} parent=35 // pred_fallthru
          _
      $region36: #{tpu_custom_call.1} parent=5 // pred_fallthru
        _
      %p810 = scmp.le.s32.totalorder 2, %s15
      // Predicated region
      $region57: #{tpu_custom_call.1} parent=5 // pred_check
        %p811 = pneg %p810
      $region58: #{tpu_custom_call.1} parent=5 // pred_check_branch
        %813 = sbr.rel (%p811) target = $region60
      $region59: #{tpu_custom_call.1} parent=5 // pred_region
        %s814 = ssub.s32 %s15, 2
        // Predicated region
        $region61: #{tpu_custom_call.1} parent=59 // pred_check
          %p815 = pneg %p157
        $region62: #{tpu_custom_call.1} parent=59 // pred_check_branch
          %817 = sbr.rel (%p815) target = $region64
        $region63: #{tpu_custom_call.1} parent=59 // pred_region
          %s818 = sand.u32 %s142, 1
          %s819 = scalar_lea.sflag [#allocation5], %s818
          %s820 = sand.u32 %s142, 1
          %s821 = smul.addr %s820, 64
          %s822 = scalar_lea.vmem [#allocation8], %s821
          %823 = dma.done %s819, 1024
        $region64: #{tpu_custom_call.1} parent=59 // pred_fallthru
          _
      $region60: #{tpu_custom_call.1} parent=5 // pred_fallthru
        _
    $region6: #{tpu_custom_call.1} parent=1 // loop_footer
      %s19 = sadd.s32 1, %s15
    $region7: #{tpu_custom_call.1} parent=1 // loop_footer_branch
      %14 = sbr.rel target = $region3
    $region8: #{tpu_custom_call.1} parent=1 // loop_exit
      _
    %824 = vsyncpa [#allocation4], 1
    %s825 = scalar_lea.sflag [#allocation4], 1
    %826 = vsyncpa %s825, 1
    %827 = vsyncpa [#allocation7], 1
    %828 = vsyncpa [#allocation5], 1
    %s829 = scalar_lea.sflag [#allocation5], 1
    %830 = vsyncpa %s829, 1

</llo_original>
